<compile_context>
chip_gen: v7x
topology: tpu7x:2x2x1
jax: 0.10.0
libtpu: 0.0.40
codegen_flags: <defaults>
</compile_context>

<pallas_src>
import functools

import jax
import jax.numpy as jnp
from jax.experimental import pallas as pl
from jax.experimental.pallas import tpu as pltpu


def _dice_sums_kernel(pred_ref, targ_ref, inter_ref, union_ref, *,
                      hw, col_tile, mask_cols):
    """Grid = (row_tiles, col_tiles); the column axis (last) is the reduction.

    The output BlockSpecs return the same block index for every j, so
    inter_ref / union_ref stay VMEM-resident across the reduction axis and
    serve as accumulators directly.
    """
    j = pl.program_id(1)

    @pl.when(j == 0)
    def _():
        inter_ref[...] = jnp.zeros_like(inter_ref)
        union_ref[...] = jnp.zeros_like(union_ref)

    x = pred_ref[...].astype(jnp.float32)
    # sigmoid(x) = 0.5 * (tanh(x/2) + 1): single EUP transcendental.
    p = 0.5 * (jnp.tanh(0.5 * x) + 1.0)
    t = targ_ref[...].astype(jnp.float32)

    inter_part = p * t
    union_part = p + t

    if mask_cols:  # static Python bool: only emitted when HW % col_tile != 0
        col = jax.lax.broadcasted_iota(jnp.int32, inter_part.shape, 1)
        valid = (j * col_tile + col) < hw
        inter_part = jnp.where(valid, inter_part, 0.0)
        union_part = jnp.where(valid, union_part, 0.0)

    inter_ref[...] += jnp.sum(inter_part, axis=-1, keepdims=True)
    union_ref[...] += jnp.sum(union_part, axis=-1, keepdims=True)


def _min_sublane(dtype):
    # f32 -> 8, bf16/f16 -> 16, int8/fp8 -> 32 (packed-sublane tile minimum).
    return {4: 8, 2: 16, 1: 32}.get(jnp.dtype(dtype).itemsize, 8)


@functools.partial(jax.jit, static_argnames=("smooth",))
def dice_loss(pred, target, smooth=1e-5):
    """Pallas implementation of DiceLoss.forward (pred, target: NCHW)."""
    B, C, H, W = pred.shape
    BC, HW = B * C, H * W

    pred2d = pred.reshape(BC, HW)
    targ2d = target.reshape(BC, HW)

    sub = max(_min_sublane(pred.dtype), _min_sublane(target.dtype))

    # --- row tile: multiple of the sublane minimum (or the full dim when BC
    # is tiny / unaligned), capped at 256 rows. ---
    if BC < sub:
        row_tile = BC                       # full-dim single block
    elif BC % sub == 0:
        row_tile = min(256, BC)
    else:
        row_tile = min(256, (BC // sub) * sub)   # trailing partial row block
    # Keep at least two row blocks when BC allows it, so the "parallel" row
    # axis can shard across v7x's two TensorCores.
    if row_tile >= BC and BC > sub and BC % sub == 0:
        row_tile = max(sub, ((BC // 2) // sub) * sub)

    # --- column (reduction) tile: lane-dense, sized from a ~2 MiB-per-input
    # block budget (2 inputs x 2 pipeline buffers <= 8 MiB VMEM), and never
    # larger than HW so only standard trailing partial blocks occur. ---
    block_budget_bytes = 2 * 1024 * 1024
    if HW < 128:
        col_tile = HW                       # full-dim block (single block)
    else:
        budget_cols = max(128, ((block_budget_bytes // (4 * row_tile)) // 128) * 128)
        col_tile = min(budget_cols, (HW // 128) * 128)
    mask_cols = (HW % col_tile) != 0

    grid = (pl.cdiv(BC, row_tile), pl.cdiv(HW, col_tile))

    kernel = functools.partial(_dice_sums_kernel, hw=HW, col_tile=col_tile,
                               mask_cols=mask_cols)

    inter, union = pl.pallas_call(
        kernel,
        out_shape=(
            jax.ShapeDtypeStruct((BC, 1), jnp.float32),
            jax.ShapeDtypeStruct((BC, 1), jnp.float32),
        ),
        grid_spec=pltpu.PrefetchScalarGridSpec(
            num_scalar_prefetch=0,
            grid=grid,
            in_specs=[
                pl.BlockSpec((row_tile, col_tile), lambda i, j: (i, j)),
                pl.BlockSpec((row_tile, col_tile), lambda i, j: (i, j)),
            ],
            out_specs=[
                pl.BlockSpec((row_tile, 1), lambda i, j: (i, 0)),
                pl.BlockSpec((row_tile, 1), lambda i, j: (i, 0)),
            ],
        ),
        compiler_params=pltpu.CompilerParams(
            dimension_semantics=("parallel", "arbitrary")),
    )(pred2d, targ2d)

    dice = (2.0 * inter[:, 0] + smooth) / (union[:, 0] + smooth)
    return 1.0 - jnp.mean(dice)


def _reference_dice_loss(pred, target, smooth=1e-5):
    p = jax.nn.sigmoid(pred.astype(jnp.float32))
    t = target.astype(jnp.float32)
    inter = jnp.sum(p * t, axis=(2, 3))
    union = jnp.sum(p, axis=(2, 3)) + jnp.sum(t, axis=(2, 3))
    dice = (2.0 * inter + smooth) / (union + smooth)
    return 1.0 - jnp.mean(dice)


if __name__ == "__main__":
    key = jax.random.PRNGKey(0)
    k1, k2 = jax.random.split(key)

    B, C, H, W = 2, 4, 16, 16
    pred = jax.random.normal(k1, (B, C, H, W), dtype=jnp.float32)
    target = (jax.random.uniform(k2, (B, C, H, W)) > 0.5).astype(jnp.float32)

    loss = dice_loss(pred, target)
    jax.block_until_ready(loss)

    ref = _reference_dice_loss(pred, target)
    assert jnp.allclose(loss, ref, atol=1e-5, rtol=1e-5), (loss, ref)

    print("KERNEL_OK")
</pallas_src>

<mosaic_0001>
module attributes {stable_mosaic.version = 11 : i64} {
  func.func @_dice_sums_kernel(%arg0: i32, %arg1: i32, %arg2: memref<8x256xf32, #tpu.memory_space<vmem>>, %arg3: memref<8x256xf32, #tpu.memory_space<vmem>>, %arg4: memref<8x1xf32, #tpu.memory_space<vmem>>, %arg5: memref<8x1xf32, #tpu.memory_space<vmem>>) attributes {dimension_semantics = [#tpu.dimension_semantics<parallel>, #tpu.dimension_semantics<arbitrary>], iteration_bounds = array<i64: 1, 1>, scalar_prefetch = 0 : i64, scratch_operands = 0 : i64, tpu.core_type = #tpu.core_type<tc>, window_params = [{transform_indices = @transform_0, window_bounds = array<i64: 8, 256>}, {transform_indices = @transform_1, window_bounds = array<i64: 8, 256>}, {transform_indices = @transform_2, window_bounds = array<i64: 8, 1>}, {transform_indices = @transform_3, window_bounds = array<i64: 8, 1>}]} {
    %c0_i32 = arith.constant 0 : i32
    %0 = arith.cmpi eq, %arg1, %c0_i32 : i32
    %1 = arith.extui %0 : i1 to i32
    %c0_i32_0 = arith.constant 0 : i32
    %2 = arith.cmpi ne, %1, %c0_i32_0 : i32
    scf.if %2 {
      %cst_16 = arith.constant 0.000000e+00 : f32
      %24 = vector.broadcast %cst_16 : f32 to vector<8x1xf32>
      %c0_17 = arith.constant 0 : index
      %c0_18 = arith.constant 0 : index
      %25 = vector.load %arg4[%c0_17, %c0_18] : memref<8x1xf32, #tpu.memory_space<vmem>>, vector<8x1xf32>
      tpu.vector_store %arg4[%c0_17, %c0_18], %24 {strides = array<i32>} : memref<8x1xf32, #tpu.memory_space<vmem>>, vector<8x1xf32>,
      %cst_19 = arith.constant 0.000000e+00 : f32
      %26 = vector.broadcast %cst_19 : f32 to vector<8x1xf32>
      %c0_20 = arith.constant 0 : index
      %c0_21 = arith.constant 0 : index
      %27 = vector.load %arg5[%c0_20, %c0_21] : memref<8x1xf32, #tpu.memory_space<vmem>>, vector<8x1xf32>
      tpu.vector_store %arg5[%c0_20, %c0_21], %26 {strides = array<i32>} : memref<8x1xf32, #tpu.memory_space<vmem>>, vector<8x1xf32>,
    } else {
    }
    %c0 = arith.constant 0 : index
    %c0_1 = arith.constant 0 : index
    %3 = vector.load %arg2[%c0, %c0_1] : memref<8x256xf32, #tpu.memory_space<vmem>>, vector<8x256xf32>
    %cst = arith.constant 5.000000e-01 : f32
    %4 = vector.broadcast %cst : f32 to vector<8x256xf32>
    %5 = arith.mulf %4, %3 : vector<8x256xf32>
    %6 = math.tanh %5 : vector<8x256xf32>
    %cst_2 = arith.constant 1.000000e+00 : f32
    %7 = vector.broadcast %cst_2 : f32 to vector<8x256xf32>
    %8 = arith.addf %6, %7 : vector<8x256xf32>
    %cst_3 = arith.constant 5.000000e-01 : f32
    %9 = vector.broadcast %cst_3 : f32 to vector<8x256xf32>
    %10 = arith.mulf %9, %8 : vector<8x256xf32>
    %c0_4 = arith.constant 0 : index
    %c0_5 = arith.constant 0 : index
    %11 = vector.load %arg3[%c0_4, %c0_5] : memref<8x256xf32, #tpu.memory_space<vmem>>, vector<8x256xf32>
    %12 = arith.mulf %10, %11 : vector<8x256xf32>
    %13 = arith.addf %10, %11 : vector<8x256xf32>
    %c0_6 = arith.constant 0 : index
    %c0_7 = arith.constant 0 : index
    %14 = vector.load %arg4[%c0_6, %c0_7] : memref<8x1xf32, #tpu.memory_space<vmem>>, vector<8x1xf32>
    %cst_8 = arith.constant dense<0.000000e+00> : vector<8xf32>
    %15 = vector.multi_reduction <add>, %12, %cst_8 [1] : vector<8x256xf32> to vector<8xf32>
    %16 = vector.shape_cast %15 : vector<8xf32> to vector<8x1xf32>
    %17 = arith.addf %14, %16 : vector<8x1xf32>
    %c0_9 = arith.constant 0 : index
    %c0_10 = arith.constant 0 : index
    %18 = vector.load %arg4[%c0_9, %c0_10] : memref<8x1xf32, #tpu.memory_space<vmem>>, vector<8x1xf32>
    tpu.vector_store %arg4[%c0_9, %c0_10], %17 {strides = array<i32>} : memref<8x1xf32, #tpu.memory_space<vmem>>, vector<8x1xf32>,
    %c0_11 = arith.constant 0 : index
    %c0_12 = arith.constant 0 : index
    %19 = vector.load %arg5[%c0_11, %c0_12] : memref<8x1xf32, #tpu.memory_space<vmem>>, vector<8x1xf32>
    %cst_13 = arith.constant dense<0.000000e+00> : vector<8xf32>
    %20 = vector.multi_reduction <add>, %13, %cst_13 [1] : vector<8x256xf32> to vector<8xf32>
    %21 = vector.shape_cast %20 : vector<8xf32> to vector<8x1xf32>
    %22 = arith.addf %19, %21 : vector<8x1xf32>
    %c0_14 = arith.constant 0 : index
    %c0_15 = arith.constant 0 : index
    %23 = vector.load %arg5[%c0_14, %c0_15] : memref<8x1xf32, #tpu.memory_space<vmem>>, vector<8x1xf32>
    tpu.vector_store %arg5[%c0_14, %c0_15], %22 {strides = array<i32>} : memref<8x1xf32, #tpu.memory_space<vmem>>, vector<8x1xf32>,
    return
  }
  func.func @transform_0(%arg0: i32, %arg1: i32) -> (i32, i32) {
    %c0_i32 = arith.constant 0 : i32
    return %arg0, %arg1 : i32, i32
  }
  func.func @transform_1(%arg0: i32, %arg1: i32) -> (i32, i32) {
    %c0_i32 = arith.constant 0 : i32
    return %arg0, %arg1 : i32, i32
  }
  func.func @transform_2(%arg0: i32, %arg1: i32) -> (i32, i32) {
    %c0_i32 = arith.constant 0 : i32
    %c0_i32_0 = arith.constant 0 : i32
    return %arg0, %c0_i32 : i32, i32
  }
  func.func @transform_3(%arg0: i32, %arg1: i32) -> (i32, i32) {
    %c0_i32 = arith.constant 0 : i32
    %c0_i32_0 = arith.constant 0 : i32
    return %arg0, %c0_i32 : i32, i32
  }
}

</mosaic_0001>

<llo_original>
// kernel: dice_loss.1
$region0: #{dice_loss.1}
  #allocation0 [shape = 'u32[]', space=smem, size = 0x4, offset = 0x4, fixed_abs, tag = 'smem constant byte address 0x4 - core index']
  #allocation1 [shape = 'u32[144,128]{1,0:T(1,128)}', space=vmem, size = 0x12000, scoped, tag = 'internal scratch']
  %s0 = inlined_call_operand.vmem [shape: f32[8,256], index: 0, kind: input, shape index: {}]
  %s1 = inlined_call_operand.vmem [shape: f32[8,256], index: 1, kind: input, shape index: {}]
  %s2 = inlined_call_operand.vmem [shape: f32[8,1], index: 2, kind: output, shape index: {0}]
  %s3 = inlined_call_operand.vmem [shape: f32[8,1], index: 3, kind: output, shape index: {1}]
  %4 = xla_tuple %s2, %s3
  %s5 = sld [smem:[#allocation0]]
  $region30: #{dice_loss.1} parent=0
    _
  %s7 = ssub.s32 1, %s5
  %s8 = scalar_select 0, %s7, %s5
  // Predicated region
  $region2: #{dice_loss.1} parent=0 // pred_check
    _
  $region3: #{dice_loss.1} parent=0 // pred_check_branch
    %10 = sbr.rel (0) target = $region5
  $region4: #{dice_loss.1} parent=0 // pred_region
    _
  $region5: #{dice_loss.1} parent=0 // pred_fallthru
    _
  // Predicated region
  $region6: #{dice_loss.1} parent=0 // pred_check
    _
  $region7: #{dice_loss.1} parent=0 // pred_check_branch
    %12 = sbr.rel (0) target = $region9
  $region8: #{dice_loss.1} parent=0 // pred_region
    _
  $region9: #{dice_loss.1} parent=0 // pred_fallthru
    _
  %p13 = scmp.eq.s32.totalorder 0, 0
  // Predicated region
  $region10: #{dice_loss.1} parent=0 // pred_check
    %p14 = pneg %p13
  $region11: #{dice_loss.1} parent=0 // pred_check_branch
    %16 = sbr.rel (%p14) target = $region13
  $region12: #{dice_loss.1} parent=0 // pred_region
    %vm17 = vcmask 7168
    %18 = vst.msk [vmem:[%s2] sm:$0xff] %vm17, 0.0
    %19 = vst.msk [vmem:[%s3] sm:$0xff] %vm17, 0.0
  $region13: #{dice_loss.1} parent=0 // pred_fallthru
    _
  %v20 = vld [vmem:[%s0] sm:$0xff]
  %v21 = vld [vmem:[%s0 + $0x8] sm:$0xff]
  %v22 = vmul.f32 %v20, 0.5
  %v23 = vmul.f32 %v21, 0.5
  %v24 = vtanh.pop %v22
  %v25 = vtanh.pop %v23
  %v26 = vadd.f32 %v24, 1.0
  %v27 = vadd.f32 %v25, 1.0
  %v28 = vmul.f32 %v26, 0.5
  %v29 = vmul.f32 %v27, 0.5
  %v30 = vld [vmem:[%s1] sm:$0xff]
  %v31 = vld [vmem:[%s1 + $0x8] sm:$0xff]
  %v32 = vmul.f32 %v28, %v30
  %v33 = vmul.f32 %v29, %v31
  %v34 = vadd.f32 %v28, %v30
  %v35 = vadd.f32 %v29, %v31
  %v36 = vld [vmem:[%s2] sm:$0xff]
  %v37 = vadd.f32 %v32, %v33
  %38 = vadd.xlane.f32.xlu0 %v37
  %v39 = vpop.xlane.xlu0 %38
  %v40 = vadd.f32 %v36, %v39
  %vm41 = vcmask 7168
  %42 = vst.msk [vmem:[%s2] sm:$0xff] %vm41, %v40
  %v43 = vld [vmem:[%s3] sm:$0xff]
  %v44 = vadd.f32 %v34, %v35
  %45 = vadd.xlane.f32.xlu0 %v44
  %v46 = vpop.xlane.xlu0 %45
  %v47 = vadd.f32 %v43, %v46
  %48 = vst.msk [vmem:[%s3] sm:$0xff] %vm41, %v47
  // Predicated region
  $region14: #{dice_loss.1} parent=0 // pred_check
    _
  $region15: #{dice_loss.1} parent=0 // pred_check_branch
    %50 = sbr.rel (0) target = $region17
  $region16: #{dice_loss.1} parent=0 // pred_region
    _
  $region17: #{dice_loss.1} parent=0 // pred_fallthru
    _
  // Predicated region
  $region18: #{dice_loss.1} parent=0 // pred_check
    _
  $region19: #{dice_loss.1} parent=0 // pred_check_branch
    %52 = sbr.rel (0) target = $region21
  $region20: #{dice_loss.1} parent=0 // pred_region
    _
  $region21: #{dice_loss.1} parent=0 // pred_fallthru
    _
  // Predicated region
  $region22: #{dice_loss.1} parent=0 // pred_check
    _
  $region23: #{dice_loss.1} parent=0 // pred_check_branch
    %54 = sbr.rel (0) target = $region25
  $region24: #{dice_loss.1} parent=0 // pred_region
    _
  $region25: #{dice_loss.1} parent=0 // pred_fallthru
    _
  // Predicated region
  $region26: #{dice_loss.1} parent=0 // pred_check
    _
  $region27: #{dice_loss.1} parent=0 // pred_check_branch
    %56 = sbr.rel (0) target = $region29
  $region28: #{dice_loss.1} parent=0 // pred_region
    _
  $region29: #{dice_loss.1} parent=0 // pred_fallthru
    _

</llo_original>
